<compile_context>
chip_gen: v5e
topology: v5e:2x2
jax: 0.10.0
libtpu: 0.0.40
codegen_flags: <defaults>
</compile_context>

<pallas_src>
import functools
from typing import NamedTuple

import jax
import jax.numpy as jnp
from jax.experimental import pallas as pl
from jax.experimental.pallas import tpu as pltpu


# --------------------------------------------------------------------------
# small helpers
# --------------------------------------------------------------------------
def _round_up(n, m):
    return ((n + m - 1) // m) * m


def _pad_to(a, shape):
    pads = [(0, s - d) for d, s in zip(a.shape, shape)]
    if all(p == (0, 0) for p in pads):
        return a
    return jnp.pad(a, pads)


_PHYS_VMEM = None


def _physical_vmem_bytes():
    """Physical VMEM per TensorCore (conservative 64 MiB fallback = v7x)."""
    global _PHYS_VMEM
    if _PHYS_VMEM is None:
        try:
            _PHYS_VMEM = int(pltpu.get_tpu_info().vmem_capacity_bytes)
        except Exception:
            _PHYS_VMEM = 64 * 1024 * 1024
    return _PHYS_VMEM


def _lane_align(compute_dtype, dim):
    # v6e/v7x MXU passes are 256 wide: align sub-32-bit feature dims that are
    # already >=128 to 256 (avoids half-filled MXU passes). v5e's 128-wide MXU
    # is fine at 128 either way, and tiny dims shouldn't be blown up 8x.
    if jnp.dtype(compute_dtype).itemsize < 4 and dim >= 128:
        return 256
    return 128


def _row_align(compute_dtype):
    isz = jnp.dtype(compute_dtype).itemsize
    return 8 if isz >= 4 else (16 if isz == 2 else 32)


_TB_CANDIDATES = (1024, 512, 256, 128, 64, 32, 16, 8)


def _pick_batch_tile(B, row_align, cap):
    """Largest tile with <=25% padded rows, else the one minimizing padding."""
    cands = [c for c in _TB_CANDIDATES if c % row_align == 0 and c <= cap]
    if not cands:
        return row_align
    for c in cands:                       # descending
        bp = _round_up(B, c)
        if (bp - B) * 4 <= bp:
            return c
    return min(cands, key=lambda c: (_round_up(B, c), -c))


def _tn_candidates(d_out_p, lane=128):
    """Divisors of padded D_out that are multiples of 128, descending."""
    return [d_out_p // k for k in range(1, d_out_p // lane + 1)
            if d_out_p % k == 0 and (d_out_p // k) % lane == 0]


def _vmem_footprint(tb, tn, d_in_p, d_out_p, c_isz, o_isz, col_tiled,
                    weight_bufs, io_bufs):
    """Rough VMEM bytes for the chosen tiling (weights + streamed tiles + h)."""
    if not col_tiled:
        w = (d_in_p + d_out_p) * d_out_p * c_isz * weight_bufs
        b = 2 * d_out_p * 4 * weight_bufs
        io = tb * (d_in_p * c_isz + d_out_p * o_isz) * io_bufs
        h = tb * d_out_p * 4                    # f32 intermediate headroom
        return w + b + io + h
    w1 = d_in_p * d_out_p * c_isz * weight_bufs
    b1 = d_out_p * 4 * weight_bufs
    w2 = d_out_p * tn * c_isz * 2               # column tile, double-buffered
    b2 = tn * 4 * 2
    io = tb * (d_in_p * c_isz + tn * o_isz) * io_bufs
    h = tb * d_out_p * c_isz + tb * tn * 4      # scratch + f32 partials
    return w1 + b1 + w2 + b2 + io + h


# --------------------------------------------------------------------------
# kernels
# --------------------------------------------------------------------------
def _mlp_kernel_resident(x_ref, w1_ref, b1_ref, w2_ref, b2_ref, o_ref):
    # Linear 1 on the MXU with f32 accumulation, f32 bias + ReLU epilogue.
    h = jnp.dot(x_ref[...], w1_ref[...], preferred_element_type=jnp.float32)
    h = jnp.maximum(h + b1_ref[...], 0.0)       # b1 is (1, D_out_p) f32
    # Linear 2: feed the MXU in the weight dtype (bf16 path stays bf16).
    y = jnp.dot(h.astype(w2_ref.dtype), w2_ref[...],
                preferred_element_type=jnp.float32)
    y = jnp.maximum(y + b2_ref[...], 0.0)       # final self.activation ReLU
    o_ref[...] = y.astype(o_ref.dtype)


def _mlp_kernel_coltiled(x_ref, w1_ref, b1_ref, w2_ref, b2_ref, o_ref, h_ref):
    # Grid = (batch tile i, output-column tile n); n is the inner "arbitrary"
    # axis. h is computed once per batch tile (n == 0) and reused across n.
    @pl.when(pl.program_id(1) == 0)
    def _():
        h = jnp.dot(x_ref[...], w1_ref[...],
                    preferred_element_type=jnp.float32)
        h = jnp.maximum(h + b1_ref[...], 0.0)
        h_ref[...] = h.astype(h_ref.dtype)

    y = jnp.dot(h_ref[...], w2_ref[...], preferred_element_type=jnp.float32)
    y = jnp.maximum(y + b2_ref[...], 0.0)
    o_ref[...] = y.astype(o_ref.dtype)


# --------------------------------------------------------------------------
# pallas_call builder
# --------------------------------------------------------------------------
@functools.partial(
    jax.jit,
    static_argnames=("tb", "tn", "col_tiled", "use_pipeline_mode",
                     "io_buffers", "out_dtype_name", "vmem_limit"))
def _mlp_pallas(x_p, w1_p, b1_p, w2_p, b2_p, *, tb, tn, col_tiled,
                use_pipeline_mode, io_buffers, out_dtype_name, vmem_limit):
    B_p, D_in_p = x_p.shape
    D_out_p = w1_p.shape[1]
    out_dtype = jnp.dtype(out_dtype_name)
    c_isz = x_p.dtype.itemsize
    nb = B_p // tb

    def spec(shape, index_map, bufs=None):
        if bufs is None or not use_pipeline_mode:
            return pl.BlockSpec(shape, index_map)
        return pl.BlockSpec(shape, index_map, pipeline_mode=pl.Buffered(bufs))

    io_bufs = io_buffers if io_buffers != 2 else None   # 2 == default

    flops = 2 * B_p * D_out_p * (D_in_p + D_out_p)
    bytes_accessed = (
        x_p.size * c_isz + w1_p.size * c_isz + w2_p.size * c_isz
        + b1_p.size * 4 + b2_p.size * 4 + B_p * D_out_p * out_dtype.itemsize)
    cost = pl.CostEstimate(flops=flops, transcendentals=0,
                           bytes_accessed=bytes_accessed)

    if not col_tiled:
        return pl.pallas_call(
            _mlp_kernel_resident,
            out_shape=jax.ShapeDtypeStruct((B_p, D_out_p), out_dtype),
            grid=(nb,),
            in_specs=[
                spec((tb, D_in_p), lambda i: (i, 0), io_bufs),       # x
                spec((D_in_p, D_out_p), lambda i: (0, 0), 1),        # w1
                spec((1, D_out_p), lambda i: (0, 0), 1),             # b1
                spec((D_out_p, D_out_p), lambda i: (0, 0), 1),       # w2
                spec((1, D_out_p), lambda i: (0, 0), 1),             # b2
            ],
            out_specs=spec((tb, D_out_p), lambda i: (i, 0), io_bufs),
            compiler_params=pltpu.CompilerParams(
                dimension_semantics=("parallel",),
                vmem_limit_bytes=vmem_limit),
            cost_estimate=cost,
        )(x_p, w1_p, b1_p, w2_p, b2_p)

    nn = D_out_p // tn
    return pl.pallas_call(
        _mlp_kernel_coltiled,
        out_shape=jax.ShapeDtypeStruct((B_p, D_out_p), out_dtype),
        grid=(nb, nn),
        in_specs=[
            spec((tb, D_in_p), lambda i, n: (i, 0), io_bufs),        # x
            spec((D_in_p, D_out_p), lambda i, n: (0, 0), 1),         # w1
            spec((1, D_out_p), lambda i, n: (0, 0), 1),              # b1
            pl.BlockSpec((D_out_p, tn), lambda i, n: (0, n)),        # w2 tile
            pl.BlockSpec((1, tn), lambda i, n: (0, n)),              # b2 tile
        ],
        out_specs=spec((tb, tn), lambda i, n: (i, n), io_bufs),
        scratch_shapes=[pltpu.VMEM((tb, D_out_p), x_p.dtype)],        # h
        compiler_params=pltpu.CompilerParams(
            dimension_semantics=("parallel", "arbitrary"),
            vmem_limit_bytes=vmem_limit),
        cost_estimate=cost,
    )(x_p, w1_p, b1_p, w2_p, b2_p)


# --------------------------------------------------------------------------
# public wrapper
# --------------------------------------------------------------------------
class MLPParams(NamedTuple):
    w1: jax.Array
    b1: jax.Array
    w2: jax.Array
    b2: jax.Array
    d_in: int
    d_out: int
    d_in_p: int
    d_out_p: int
    compute_dtype: str


def prepare_mlp_params(w1, b1, w2, b2, *, compute_dtype=None):
    """Pad + cast weights/biases once (hoisted out of the per-call path).

    Weights are [in_features, out_features] (transpose of nn.Linear.weight).
    compute_dtype defaults to the weight dtype; on v6e/v7x, bfloat16 is the
    fast MXU path (f32 accumulation is kept either way).
    """
    if compute_dtype is None:
        compute_dtype = w1.dtype
    cdt = jnp.dtype(compute_dtype)
    D_in, D_out = w1.shape
    d_in_p = _round_up(D_in, _lane_align(cdt, D_in))
    d_out_p = _round_up(D_out, _lane_align(cdt, D_out))
    w1_p = _pad_to(jnp.asarray(w1, cdt), (d_in_p, d_out_p))
    w2_p = _pad_to(jnp.asarray(w2, cdt), (d_out_p, d_out_p))
    # Biases stay f32 so the bias/ReLU epilogue runs in f32 (v5e friendly).
    b1_p = _pad_to(jnp.asarray(b1, jnp.float32).reshape(1, -1), (1, d_out_p))
    b2_p = _pad_to(jnp.asarray(b2, jnp.float32).reshape(1, -1), (1, d_out_p))
    return MLPParams(w1_p, b1_p, w2_p, b2_p, D_in, D_out, d_in_p, d_out_p,
                     str(cdt))


_PIPELINE_MODE_OK = True   # flipped to False if pl.Buffered is unsupported


def mlp_forward(x, params, *, batch_tile=512, out_dtype=None,
                force_col_tile=False, col_tile=None):
    global _PIPELINE_MODE_OK
    B, D_in = x.shape
    if D_in != params.d_in:
        raise ValueError(f"expected x with {params.d_in} features, got {D_in}")

    cdt = jnp.dtype(params.compute_dtype)
    c_isz = cdt.itemsize
    out_dtype = jnp.dtype(out_dtype) if out_dtype is not None else jnp.dtype(x.dtype)
    o_isz = out_dtype.itemsize
    d_in_p, d_out_p = params.d_in_p, params.d_out_p
    row_align = _row_align(cdt)

    # ---- batch tile: padding-aware, aligned for the compute dtype ----------
    cap = max(row_align, (int(batch_tile) // row_align) * row_align)
    tb = _pick_batch_tile(B, row_align, cap)
    b_p = _round_up(B, tb)

    # Megacore: keep >=2 steps on the "parallel" batch axis when there is
    # enough batch to split (v7x has 2 TensorCores; near-free elsewhere).
    if b_p // tb == 1 and b_p >= 2 * row_align:
        tb = _round_up((b_p + 1) // 2, row_align)
        b_p = _round_up(B, tb)

    # ---- VMEM-budget-driven path / tile selection ---------------------------
    budget = int(_physical_vmem_bytes() * 0.8)
    io_buffers = 3 if (d_in_p + d_out_p) <= 512 and (b_p // tb) >= 4 else 2

    def fits(tb_, tn_, col_tiled_):
        return _vmem_footprint(tb_, tn_, d_in_p, d_out_p, c_isz, o_isz,
                               col_tiled_, 1, io_buffers) <= budget

    col_tiled = bool(force_col_tile)
    tn = d_out_p
    if not col_tiled and not fits(tb, tn, False):
        col_tiled = True                      # weights too big to sit resident
    if col_tiled:
        if col_tile is not None:
            if col_tile % 128 or d_out_p % col_tile:
                raise ValueError("col_tile must be a multiple of 128 that "
                                 "divides the padded D_out")
            tn = int(col_tile)
        else:
            for cand in _tn_candidates(d_out_p):
                tn = cand
                if fits(tb, tn, True):
                    break
        while not fits(tb, tn, True) and tb > row_align:
            tb = max(row_align, _round_up(tb // 2, row_align))
            b_p = _round_up(B, tb)
    # TODO(synk): extremely large D_in (w1 alone exceeding VMEM) would also
    # need K-tiling of the first matmul; not implemented here.

    # Footprint-derived VMEM limit (sized for double-buffered weights so the
    # no-pipeline_mode fallback also fits), capped at ~80% of physical VMEM.
    fp2 = _vmem_footprint(tb, tn, d_in_p, d_out_p, c_isz, o_isz, col_tiled,
                          2, io_buffers)
    vmem_limit = int(min(budget, max(32 * 1024 * 1024,
                                     fp2 * 5 // 4 + 4 * 1024 * 1024)))

    # ---- run ----------------------------------------------------------------
    x_p = _pad_to(x.astype(cdt), (b_p, d_in_p))
    kwargs = dict(tb=tb, tn=tn, col_tiled=col_tiled, io_buffers=io_buffers,
                  out_dtype_name=out_dtype.name, vmem_limit=vmem_limit)

    if _PIPELINE_MODE_OK:
        try:
            out = _mlp_pallas(x_p, params.w1, params.b1, params.w2, params.b2,
                              use_pipeline_mode=True, **kwargs)
            return out[:B, :params.d_out]
        except Exception:
            # pipeline_mode / pl.Buffered unsupported on this jax version ->
            # fall back to default double-buffered BlockSpecs.
            _PIPELINE_MODE_OK = False
    out = _mlp_pallas(x_p, params.w1, params.b1, params.w2, params.b2,
                      use_pipeline_mode=False, **kwargs)
    return out[:B, :params.d_out]


# --------------------------------------------------------------------------
# reference + test
# --------------------------------------------------------------------------
def init_mlp_params(key, D_in, D_out, dtype=jnp.float32):
    """Deterministic init mimicking torch.nn.Linear (uniform +/- 1/sqrt(fan_in))."""
    k1, k2, k3, k4 = jax.random.split(key, 4)
    bound1 = 1.0 / (D_in ** 0.5)
    bound2 = 1.0 / (D_out ** 0.5)
    w1 = jax.random.uniform(k1, (D_in, D_out), dtype, -bound1, bound1)
    b1 = jax.random.uniform(k2, (D_out,), dtype, -bound1, bound1)
    w2 = jax.random.uniform(k3, (D_out, D_out), dtype, -bound2, bound2)
    b2 = jax.random.uniform(k4, (D_out,), dtype, -bound2, bound2)
    return w1, b1, w2, b2


def mlp_reference(x, w1, b1, w2, b2):
    h = jnp.maximum(x @ w1 + b1, 0.0)
    return jnp.maximum(h @ w2 + b2, 0.0)


if __name__ == "__main__":
    B, D_in, D_out = 8, 32, 32
    key = jax.random.PRNGKey(0)
    kx, kp = jax.random.split(key)
    x = jax.random.normal(kx, (B, D_in), jnp.float32)
    w1, b1, w2, b2 = init_mlp_params(kp, D_in, D_out)
    ref = mlp_reference(x, w1, b1, w2, b2)

    # 1) f32 resident-weight path.
    params = prepare_mlp_params(w1, b1, w2, b2)
    out = jax.block_until_ready(mlp_forward(x, params))
    assert out.shape == (B, D_out)
    assert jnp.allclose(out, ref, atol=1e-5, rtol=1e-5)

    # 2) Non-aligned batch exercises the padding/slicing path.
    out5 = jax.block_until_ready(mlp_forward(x[:5], params))
    assert out5.shape == (5, D_out)
    assert jnp.allclose(out5, ref[:5], atol=1e-5, rtol=1e-5)

    # 3) bf16 MXU path (weights pre-cast/padded once); looser tolerance.
    params_bf16 = prepare_mlp_params(w1, b1, w2, b2, compute_dtype=jnp.bfloat16)
    out_bf16 = jax.block_until_ready(mlp_forward(x, params_bf16))
    assert out_bf16.shape == (B, D_out)
    assert jnp.allclose(out_bf16, ref, atol=3e-2, rtol=3e-2)

    # 4) Column-tiled fallback (large-D / v7x VMEM path), forced at small
    #    shapes: grid (2 batch tiles, 2 column tiles) + h VMEM scratch reuse.
    D_in2, D_out2 = 48, 200
    k2x, k2p = jax.random.split(jax.random.PRNGKey(1))
    x2 = jax.random.normal(k2x, (12, D_in2), jnp.float32)
    p2 = init_mlp_params(k2p, D_in2, D_out2)
    ref2 = mlp_reference(x2, *p2)
    params2 = prepare_mlp_params(*p2)
    out2 = jax.block_until_ready(
        mlp_forward(x2, params2, force_col_tile=True, col_tile=128))
    assert out2.shape == (12, D_out2)
    assert jnp.allclose(out2, ref2, atol=1e-4, rtol=1e-4)

    print("KERNEL_OK")
</pallas_src>

<mosaic_0001>
module attributes {stable_mosaic.version = 11 : i64} {
  func.func @_mlp_kernel_resident(%arg0: i32, %arg1: memref<8x128xf32, #tpu.memory_space<vmem>>, %arg2: memref<128x128xf32, #tpu.memory_space<vmem>>, %arg3: memref<1x128xf32, #tpu.memory_space<vmem>>, %arg4: memref<128x128xf32, #tpu.memory_space<vmem>>, %arg5: memref<1x128xf32, #tpu.memory_space<vmem>>, %arg6: memref<8x128xf32, #tpu.memory_space<vmem>>) attributes {dimension_semantics = [#tpu.dimension_semantics<parallel>], iteration_bounds = array<i64: 1>, scalar_prefetch = 0 : i64, scratch_operands = 0 : i64, tpu.core_type = #tpu.core_type<tc>, window_params = [{transform_indices = @transform_0, window_bounds = array<i64: 8, 128>}, {pipeline_mode = #tpu.pipeline_mode<synchronous>, transform_indices = @transform_1, window_bounds = array<i64: 128, 128>}, {pipeline_mode = #tpu.pipeline_mode<synchronous>, transform_indices = @transform_2, window_bounds = array<i64: 1, 128>}, {pipeline_mode = #tpu.pipeline_mode<synchronous>, transform_indices = @transform_3, window_bounds = array<i64: 128, 128>}, {pipeline_mode = #tpu.pipeline_mode<synchronous>, transform_indices = @transform_4, window_bounds = array<i64: 1, 128>}, {transform_indices = @transform_5, window_bounds = array<i64: 8, 128>}]} {
    %c0 = arith.constant 0 : index
    %c0_0 = arith.constant 0 : index
    %0 = vector.load %arg1[%c0, %c0_0] : memref<8x128xf32, #tpu.memory_space<vmem>>, vector<8x128xf32>
    %c0_1 = arith.constant 0 : index
    %c0_2 = arith.constant 0 : index
    %1 = vector.load %arg2[%c0_1, %c0_2] : memref<128x128xf32, #tpu.memory_space<vmem>>, vector<128x128xf32>
    %cst = arith.constant dense<0.000000e+00> : vector<8x128xf32>
    %2 = tpu.matmul %0, %1, %cst {dimension_numbers = #tpu.dot_dimension_numbers<[1], [0], [0], [1], [0, 0, 1, 1], [], []>} : vector<8x128xf32>, vector<128x128xf32>, vector<8x128xf32> -> vector<8x128xf32>
    %c0_3 = arith.constant 0 : index
    %c0_4 = arith.constant 0 : index
    %3 = vector.load %arg3[%c0_3, %c0_4] : memref<1x128xf32, #tpu.memory_space<vmem>>, vector<1x128xf32>
    %4 = vector.broadcast %3 : vector<1x128xf32> to vector<8x128xf32>
    %5 = arith.addf %2, %4 : vector<8x128xf32>
    %cst_5 = arith.constant 0.000000e+00 : f32
    %6 = vector.broadcast %cst_5 : f32 to vector<8x128xf32>
    %7 = arith.maximumf %5, %6 : vector<8x128xf32>
    %c0_6 = arith.constant 0 : index
    %c0_7 = arith.constant 0 : index
    %8 = vector.load %arg4[%c0_6, %c0_7] : memref<128x128xf32, #tpu.memory_space<vmem>>, vector<128x128xf32>
    %cst_8 = arith.constant dense<0.000000e+00> : vector<8x128xf32>
    %9 = tpu.matmul %7, %8, %cst_8 {dimension_numbers = #tpu.dot_dimension_numbers<[1], [0], [0], [1], [0, 0, 1, 1], [], []>} : vector<8x128xf32>, vector<128x128xf32>, vector<8x128xf32> -> vector<8x128xf32>
    %c0_9 = arith.constant 0 : index
    %c0_10 = arith.constant 0 : index
    %10 = vector.load %arg5[%c0_9, %c0_10] : memref<1x128xf32, #tpu.memory_space<vmem>>, vector<1x128xf32>
    %11 = vector.broadcast %10 : vector<1x128xf32> to vector<8x128xf32>
    %12 = arith.addf %9, %11 : vector<8x128xf32>
    %cst_11 = arith.constant 0.000000e+00 : f32
    %13 = vector.broadcast %cst_11 : f32 to vector<8x128xf32>
    %14 = arith.maximumf %12, %13 : vector<8x128xf32>
    %c0_12 = arith.constant 0 : index
    %c0_13 = arith.constant 0 : index
    %15 = vector.load %arg6[%c0_12, %c0_13] : memref<8x128xf32, #tpu.memory_space<vmem>>, vector<8x128xf32>
    tpu.vector_store %arg6[%c0_12, %c0_13], %14 {strides = array<i32>} : memref<8x128xf32, #tpu.memory_space<vmem>>, vector<8x128xf32>,
    return
  }
  func.func @transform_0(%arg0: i32) -> (i32, i32) {
    %c0_i32 = arith.constant 0 : i32
    %c0_i32_0 = arith.constant 0 : i32
    return %arg0, %c0_i32 : i32, i32
  }
  func.func @transform_1(%arg0: i32) -> (i32, i32) {
    %c0_i32 = arith.constant 0 : i32
    %c0_i32_0 = arith.constant 0 : i32
    %c0_i32_1 = arith.constant 0 : i32
    return %c0_i32, %c0_i32_0 : i32, i32
  }
  func.func @transform_2(%arg0: i32) -> (i32, i32) {
    %c0_i32 = arith.constant 0 : i32
    %c0_i32_0 = arith.constant 0 : i32
    %c0_i32_1 = arith.constant 0 : i32
    return %c0_i32, %c0_i32_0 : i32, i32
  }
  func.func @transform_3(%arg0: i32) -> (i32, i32) {
    %c0_i32 = arith.constant 0 : i32
    %c0_i32_0 = arith.constant 0 : i32
    %c0_i32_1 = arith.constant 0 : i32
    return %c0_i32, %c0_i32_0 : i32, i32
  }
  func.func @transform_4(%arg0: i32) -> (i32, i32) {
    %c0_i32 = arith.constant 0 : i32
    %c0_i32_0 = arith.constant 0 : i32
    %c0_i32_1 = arith.constant 0 : i32
    return %c0_i32, %c0_i32_0 : i32, i32
  }
  func.func @transform_5(%arg0: i32) -> (i32, i32) {
    %c0_i32 = arith.constant 0 : i32
    %c0_i32_0 = arith.constant 0 : i32
    return %arg0, %c0_i32 : i32, i32
  }
}

module attributes {stable_mosaic.version = 11 : i64} {
  func.func @_mlp_kernel_resident(%arg0: i32, %arg1: memref<8x128xf32, #tpu.memory_space<vmem>>, %arg2: memref<128x128xf32, #tpu.memory_space<vmem>>, %arg3: memref<1x128xf32, #tpu.memory_space<vmem>>, %arg4: memref<128x128xf32, #tpu.memory_space<vmem>>, %arg5: memref<1x128xf32, #tpu.memory_space<vmem>>, %arg6: memref<8x128xf32, #tpu.memory_space<vmem>>) attributes {dimension_semantics = [#tpu.dimension_semantics<parallel>], iteration_bounds = array<i64: 1>, scalar_prefetch = 0 : i64, scratch_operands = 0 : i64, tpu.core_type = #tpu.core_type<tc>, window_params = [{transform_indices = @transform_0, window_bounds = array<i64: 8, 128>}, {pipeline_mode = #tpu.pipeline_mode<synchronous>, transform_indices = @transform_1, window_bounds = array<i64: 128, 128>}, {pipeline_mode = #tpu.pipeline_mode<synchronous>, transform_indices = @transform_2, window_bounds = array<i64: 1, 128>}, {pipeline_mode = #tpu.pipeline_mode<synchronous>, transform_indices = @transform_3, window_bounds = array<i64: 128, 128>}, {pipeline_mode = #tpu.pipeline_mode<synchronous>, transform_indices = @transform_4, window_bounds = array<i64: 1, 128>}, {transform_indices = @transform_5, window_bounds = array<i64: 8, 128>}]} {
    %c0 = arith.constant 0 : index
    %c0_0 = arith.constant 0 : index
    %0 = vector.load %arg1[%c0, %c0_0] : memref<8x128xf32, #tpu.memory_space<vmem>>, vector<8x128xf32>
    %c0_1 = arith.constant 0 : index
    %c0_2 = arith.constant 0 : index
    %1 = vector.load %arg2[%c0_1, %c0_2] : memref<128x128xf32, #tpu.memory_space<vmem>>, vector<128x128xf32>
    %cst = arith.constant dense<0.000000e+00> : vector<8x128xf32>
    %2 = tpu.matmul %0, %1, %cst {dimension_numbers = #tpu.dot_dimension_numbers<[1], [0], [0], [1], [0, 0, 1, 1], [], []>} : vector<8x128xf32>, vector<128x128xf32>, vector<8x128xf32> -> vector<8x128xf32>
    %c0_3 = arith.constant 0 : index
    %c0_4 = arith.constant 0 : index
    %3 = vector.load %arg3[%c0_3, %c0_4] : memref<1x128xf32, #tpu.memory_space<vmem>>, vector<1x128xf32>
    %4 = vector.broadcast %3 : vector<1x128xf32> to vector<8x128xf32>
    %5 = arith.addf %2, %4 : vector<8x128xf32>
    %cst_5 = arith.constant 0.000000e+00 : f32
    %6 = vector.broadcast %cst_5 : f32 to vector<8x128xf32>
    %7 = arith.maximumf %5, %6 : vector<8x128xf32>
    %c0_6 = arith.constant 0 : index
    %c0_7 = arith.constant 0 : index
    %8 = vector.load %arg4[%c0_6, %c0_7] : memref<128x128xf32, #tpu.memory_space<vmem>>, vector<128x128xf32>
    %cst_8 = arith.constant dense<0.000000e+00> : vector<8x128xf32>
    %9 = tpu.matmul %7, %8, %cst_8 {dimension_numbers = #tpu.dot_dimension_numbers<[1], [0], [0], [1], [0, 0, 1, 1], [], []>} : vector<8x128xf32>, vector<128x128xf32>, vector<8x128xf32> -> vector<8x128xf32>
    %c0_9 = arith.constant 0 : index
    %c0_10 = arith.constant 0 : index
    %10 = vector.load %arg5[%c0_9, %c0_10] : memref<1x128xf32, #tpu.memory_space<vmem>>, vector<1x128xf32>
    %11 = vector.broadcast %10 : vector<1x128xf32> to vector<8x128xf32>
    %12 = arith.addf %9, %11 : vector<8x128xf32>
    %cst_11 = arith.constant 0.000000e+00 : f32
    %13 = vector.broadcast %cst_11 : f32 to vector<8x128xf32>
    %14 = arith.maximumf %12, %13 : vector<8x128xf32>
    %c0_12 = arith.constant 0 : index
    %c0_13 = arith.constant 0 : index
    %15 = vector.load %arg6[%c0_12, %c0_13] : memref<8x128xf32, #tpu.memory_space<vmem>>, vector<8x128xf32>
    tpu.vector_store %arg6[%c0_12, %c0_13], %14 {strides = array<i32>} : memref<8x128xf32, #tpu.memory_space<vmem>>, vector<8x128xf32>,
    return
  }
  func.func @transform_0(%arg0: i32) -> (i32, i32) {
    %c0_i32 = arith.constant 0 : i32
    %c0_i32_0 = arith.constant 0 : i32
    return %arg0, %c0_i32 : i32, i32
  }
  func.func @transform_1(%arg0: i32) -> (i32, i32) {
    %c0_i32 = arith.constant 0 : i32
    %c0_i32_0 = arith.constant 0 : i32
    %c0_i32_1 = arith.constant 0 : i32
    return %c0_i32, %c0_i32_0 : i32, i32
  }
  func.func @transform_2(%arg0: i32) -> (i32, i32) {
    %c0_i32 = arith.constant 0 : i32
    %c0_i32_0 = arith.constant 0 : i32
    %c0_i32_1 = arith.constant 0 : i32
    return %c0_i32, %c0_i32_0 : i32, i32
  }
  func.func @transform_3(%arg0: i32) -> (i32, i32) {
    %c0_i32 = arith.constant 0 : i32
    %c0_i32_0 = arith.constant 0 : i32
    %c0_i32_1 = arith.constant 0 : i32
    return %c0_i32, %c0_i32_0 : i32, i32
  }
  func.func @transform_4(%arg0: i32) -> (i32, i32) {
    %c0_i32 = arith.constant 0 : i32
    %c0_i32_0 = arith.constant 0 : i32
    %c0_i32_1 = arith.constant 0 : i32
    return %c0_i32, %c0_i32_0 : i32, i32
  }
  func.func @transform_5(%arg0: i32) -> (i32, i32) {
    %c0_i32 = arith.constant 0 : i32
    %c0_i32_0 = arith.constant 0 : i32
    return %arg0, %c0_i32 : i32, i32
  }
}

</mosaic_0001>

<llo_original>
// kernel: _mlp_pallas.1
$region0: #{_mlp_pallas.1}
  #allocation0 [shape = 'u32[]', space=smem, size = 0x4, offset = 0x4, fixed_abs, tag = 'smem constant byte address 0x4 - core index']
  #allocation1 [shape = 'u32[72,128]{1,0:T(1,128)}', space=vmem, size = 0x9000, scoped, tag = 'internal scratch']
  %s0 = inlined_call_operand.hbm [shape: f32[8,128], index: 0, kind: input, shape index: {}]
  %s1 = inlined_call_operand.hbm [shape: f32[128,128], index: 1, kind: input, shape index: {}]
  %s2 = inlined_call_operand.vmem [shape: f32[1,128], index: 2, kind: input, shape index: {}]
  %s3 = inlined_call_operand.hbm [shape: f32[128,128], index: 3, kind: input, shape index: {}]
  %s4 = inlined_call_operand.vmem [shape: f32[1,128], index: 4, kind: input, shape index: {}]
  %s5 = inlined_call_operand.hbm [shape: f32[8,128], index: 5, kind: output, shape index: {}]
  %s6 = sld [smem:[#allocation0]]
  $region42: #{_mlp_pallas.1} parent=0
    _
  %s8 = ssub.s32 1, %s6
  %s9 = scalar_select 0, %s8, %s6
  $region1: #{_mlp_pallas.1} parent=0
    #allocation2 [shape = 'u8[4096]{0}', space=vmem, size = 0x1000, scoped, tag = 'input window, operand 0, single buffered']
    #allocation3 [shape = 's32[1]{0}', space=sflag, size = 0x4, scoped, tag = 'scoped memory for _mlp_pallas.1']
    #allocation4 [shape = 's32[1]{0}', space=sflag, size = 0x4, scoped, tag = 'scoped memory for _mlp_pallas.1']
    #allocation5 [shape = 'u8[65536]{0}', space=vmem, size = 0x10000, scoped, tag = 'input window, operand 1, single buffered']
    #allocation6 [shape = 's32[1]{0}', space=sflag, size = 0x4, scoped, tag = 'scoped memory for _mlp_pallas.1']
    #allocation7 [shape = 'u8[65536]{0}', space=vmem, size = 0x10000, scoped, tag = 'input window, operand 3, single buffered']
    #allocation8 [shape = 'u8[4096]{0}', space=vmem, size = 0x1000, scoped, tag = 'output window, operand 0, single buffered']
    %10 = vsyncpa [#allocation3], 0
    %11 = vsyncpa [#allocation6], 0
    %12 = vsyncpa [#allocation4], 0
    // Predicated region
    $region2: #{_mlp_pallas.1} parent=1 // pred_check
      _
    $region3: #{_mlp_pallas.1} parent=1 // pred_check_branch
      %14 = sbr.rel (0) target = $region5
    $region4: #{_mlp_pallas.1} parent=1 // pred_region
      %16 = vsyncadd [#allocation3], 0
      %s18 = sshll.u32 %s0, 4
      %s19 = int_to_ptr.hbm [resolvable:$true] %s18
      %s20 = sshll.u32 [#allocation2], 4
      %s21 = int_to_ptr.vmem [resolvable:$true] %s20
      %23 = dma.hbm_to_vmem [thread:$0]  %s19, 128, %s21, [#allocation3]
    $region5: #{_mlp_pallas.1} parent=1 // pred_fallthru
      _
    // Predicated region
    $region6: #{_mlp_pallas.1} parent=1 // pred_check
      _
    $region7: #{_mlp_pallas.1} parent=1 // pred_check_branch
      %25 = sbr.rel (0) target = $region9
    $region8: #{_mlp_pallas.1} parent=1 // pred_region
      %27 = vsyncadd [#allocation6], 0
      %s28 = sshll.u32 %s1, 4
      %s29 = int_to_ptr.hbm [resolvable:$true] %s28
      %s30 = sshll.u32 [#allocation5], 4
      %s31 = int_to_ptr.vmem [resolvable:$true] %s30
      %36 = dma.hbm_to_vmem [thread:$0]  %s29, 2048, %s31, [#allocation6], 128, 128, 8
    $region9: #{_mlp_pallas.1} parent=1 // pred_fallthru
      _
    // Predicated region
    $region10: #{_mlp_pallas.1} parent=1 // pred_check
      _
    $region11: #{_mlp_pallas.1} parent=1 // pred_check_branch
      %38 = sbr.rel (0) target = $region13
    $region12: #{_mlp_pallas.1} parent=1 // pred_region
      _
    $region13: #{_mlp_pallas.1} parent=1 // pred_fallthru
      _
    // Predicated region
    $region14: #{_mlp_pallas.1} parent=1 // pred_check
      _
    $region15: #{_mlp_pallas.1} parent=1 // pred_check_branch
      %40 = sbr.rel (0) target = $region17
    $region16: #{_mlp_pallas.1} parent=1 // pred_region
      %42 = vsyncadd [#allocation6], 0
      %s43 = sshll.u32 %s3, 4
      %s44 = int_to_ptr.hbm [resolvable:$true] %s43
      %s45 = sshll.u32 [#allocation7], 4
      %s46 = int_to_ptr.vmem [resolvable:$true] %s45
      %51 = dma.hbm_to_vmem [thread:$0]  %s44, 2048, %s46, [#allocation6], 128, 128, 8
    $region17: #{_mlp_pallas.1} parent=1 // pred_fallthru
      _
    // Predicated region
    $region18: #{_mlp_pallas.1} parent=1 // pred_check
      _
    $region19: #{_mlp_pallas.1} parent=1 // pred_check_branch
      %53 = sbr.rel (0) target = $region21
    $region20: #{_mlp_pallas.1} parent=1 // pred_region
      _
    $region21: #{_mlp_pallas.1} parent=1 // pred_fallthru
      _
    // Predicated region
    $region22: #{_mlp_pallas.1} parent=1 // pred_check
      _
    $region23: #{_mlp_pallas.1} parent=1 // pred_check_branch
      %55 = sbr.rel (0) target = $region25
    $region24: #{_mlp_pallas.1} parent=1 // pred_region
      %57 = dma.done [#allocation3], 128
    $region25: #{_mlp_pallas.1} parent=1 // pred_fallthru
      _
    // Predicated region
    $region26: #{_mlp_pallas.1} parent=1 // pred_check
      _
    $region27: #{_mlp_pallas.1} parent=1 // pred_check_branch
      %59 = sbr.rel (0) target = $region29
    $region28: #{_mlp_pallas.1} parent=1 // pred_region
      %61 = dma.done [#allocation6], 2048
    $region29: #{_mlp_pallas.1} parent=1 // pred_fallthru
      _
    // Predicated region
    $region30: #{_mlp_pallas.1} parent=1 // pred_check
      _
    $region31: #{_mlp_pallas.1} parent=1 // pred_check_branch
      %63 = sbr.rel (0) target = $region33
    $region32: #{_mlp_pallas.1} parent=1 // pred_region
      %65 = dma.done [#allocation6], 2048
    $region33: #{_mlp_pallas.1} parent=1 // pred_fallthru
      _
    %v66 = vld [vmem:[#allocation2] sm:$0xff]
    %v67 = vld [vmem:[#allocation5] sm:$0xff]
    %v68 = vld [vmem:[#allocation5 + $0x8] sm:$0xff]
    %v69 = vld [vmem:[#allocation5 + $0x10] sm:$0xff]
    %v70 = vld [vmem:[#allocation5 + $0x18] sm:$0xff]
    %v71 = vld [vmem:[#allocation5 + $0x20] sm:$0xff]
    %v72 = vld [vmem:[#allocation5 + $0x28] sm:$0xff]
    %v73 = vld [vmem:[#allocation5 + $0x30] sm:$0xff]
    %v74 = vld [vmem:[#allocation5 + $0x38] sm:$0xff]
    %v75 = vld [vmem:[#allocation5 + $0x40] sm:$0xff]
    %v76 = vld [vmem:[#allocation5 + $0x48] sm:$0xff]
    %v77 = vld [vmem:[#allocation5 + $0x50] sm:$0xff]
    %v78 = vld [vmem:[#allocation5 + $0x58] sm:$0xff]
    %v79 = vld [vmem:[#allocation5 + $0x60] sm:$0xff]
    %v80 = vld [vmem:[#allocation5 + $0x68] sm:$0xff]
    %v81 = vld [vmem:[#allocation5 + $0x70] sm:$0xff]
    %v82 = vld [vmem:[#allocation5 + $0x78] sm:$0xff]
    %v83 = vld [vmem:[%s2] sm:$0x1]
    %v85 = vperm.slane %v83, 0
    %87 = vmatpush.msra.mxu0 %v82
    %88 = vmatpush.msra.mxu0 %v81
    %89 = vmatpush.msra.mxu0 %v80
    %90 = vmatpush.msra.mxu0 %v79
    %91 = vmatpush.msra.mxu0 %v78
    %92 = vmatpush.msra.mxu0 %v77
    %93 = vmatpush.msra.mxu0 %v76
    %94 = vmatpush.msra.mxu0 %v75
    %95 = vmatpush.msra.mxu0 %v74
    %96 = vmatpush.msra.mxu0 %v73
    %97 = vmatpush.msra.mxu0 %v72
    %98 = vmatpush.msra.mxu0 %v71
    %99 = vmatpush.msra.mxu0 %v70
    %100 = vmatpush.msra.mxu0 %v69
    %101 = vmatpush.msra.mxu0 %v68
    %102 = vmatpush.msra.mxu0 %v67
    %103 = vmatmul.f32.gmra.mxu0 %v66
    %v104 = vpop.f32.mrf.mxu0
    %v105 = vadd.f32 %v85, %v104
    %106 = vdwg.mxu0
    %v107 = vmax.f32 %v105, 0.0
    %v108 = vld [vmem:[#allocation7] sm:$0xff]
    %v109 = vld [vmem:[#allocation7 + $0x8] sm:$0xff]
    %v110 = vld [vmem:[#allocation7 + $0x10] sm:$0xff]
    %v111 = vld [vmem:[#allocation7 + $0x18] sm:$0xff]
    %v112 = vld [vmem:[#allocation7 + $0x20] sm:$0xff]
    %v113 = vld [vmem:[#allocation7 + $0x28] sm:$0xff]
    %v114 = vld [vmem:[#allocation7 + $0x30] sm:$0xff]
    %v115 = vld [vmem:[#allocation7 + $0x38] sm:$0xff]
    %v116 = vld [vmem:[#allocation7 + $0x40] sm:$0xff]
    %v117 = vld [vmem:[#allocation7 + $0x48] sm:$0xff]
    %v118 = vld [vmem:[#allocation7 + $0x50] sm:$0xff]
    %v119 = vld [vmem:[#allocation7 + $0x58] sm:$0xff]
    %v120 = vld [vmem:[#allocation7 + $0x60] sm:$0xff]
    %v121 = vld [vmem:[#allocation7 + $0x68] sm:$0xff]
    %v122 = vld [vmem:[#allocation7 + $0x70] sm:$0xff]
    %v123 = vld [vmem:[#allocation7 + $0x78] sm:$0xff]
    %v124 = vld [vmem:[%s4] sm:$0x1]
    %v126 = vperm.slane %v124, 0
    %128 = vmatpush.msra.mxu0 %v123
    %129 = vmatpush.msra.mxu0 %v122
    %130 = vmatpush.msra.mxu0 %v121
    %131 = vmatpush.msra.mxu0 %v120
    %132 = vmatpush.msra.mxu0 %v119
    %133 = vmatpush.msra.mxu0 %v118
    %134 = vmatpush.msra.mxu0 %v117
    %135 = vmatpush.msra.mxu0 %v116
    %136 = vmatpush.msra.mxu0 %v115
    %137 = vmatpush.msra.mxu0 %v114
    %138 = vmatpush.msra.mxu0 %v113
    %139 = vmatpush.msra.mxu0 %v112
    %140 = vmatpush.msra.mxu0 %v111
    %141 = vmatpush.msra.mxu0 %v110
    %142 = vmatpush.msra.mxu0 %v109
    %143 = vmatpush.msra.mxu0 %v108
    %144 = vmatmul.f32.gmra.mxu0 %v107
    %v145 = vpop.f32.mrf.mxu0
    %v146 = vadd.f32 %v126, %v145
    %147 = vdwg.mxu0
    %v148 = vmax.f32 %v146, 0.0
    %149 = vst [vmem:[#allocation8] sm:$0xff] %v148
    // Predicated region
    $region34: #{_mlp_pallas.1} parent=1 // pred_check
      _
    $region35: #{_mlp_pallas.1} parent=1 // pred_check_branch
      %151 = sbr.rel (0) target = $region37
    $region36: #{_mlp_pallas.1} parent=1 // pred_region
      %153 = vsyncadd [#allocation4], 0
      %s155 = sshll.u32 [#allocation8], 4
      %s156 = int_to_ptr.vmem [resolvable:$true] %s155
      %s157 = sshll.u32 %s5, 4
      %s158 = int_to_ptr.hbm [resolvable:$true] %s157
      %160 = dma.vmem_to_hbm [thread:$0]  %s156, 128, %s158, [#allocation4]
    $region37: #{_mlp_pallas.1} parent=1 // pred_fallthru
      _
    // Predicated region
    $region38: #{_mlp_pallas.1} parent=1 // pred_check
      _
    $region39: #{_mlp_pallas.1} parent=1 // pred_check_branch
      %162 = sbr.rel (0) target = $region41
    $region40: #{_mlp_pallas.1} parent=1 // pred_region
      %164 = dma.done [#allocation4], 128
    $region41: #{_mlp_pallas.1} parent=1 // pred_fallthru
      _
    %165 = vsyncpa [#allocation3], 1
    %166 = vsyncpa [#allocation6], 1
    %167 = vsyncpa [#allocation4], 1

// kernel: _mlp_pallas.1
$region0: #{_mlp_pallas.1}
  #allocation0 [shape = 'u32[]', space=smem, size = 0x4, offset = 0x4, fixed_abs, tag = 'smem constant byte address 0x4 - core index']
  #allocation1 [shape = 'u32[72,128]{1,0:T(1,128)}', space=vmem, size = 0x9000, scoped, tag = 'internal scratch']
  %s0 = inlined_call_operand.hbm [shape: f32[8,128], index: 0, kind: input, shape index: {}]
  %s1 = inlined_call_operand.hbm [shape: f32[128,128], index: 1, kind: input, shape index: {}]
  %s2 = inlined_call_operand.vmem [shape: f32[1,128], index: 2, kind: input, shape index: {}]
  %s3 = inlined_call_operand.hbm [shape: f32[128,128], index: 3, kind: input, shape index: {}]
  %s4 = inlined_call_operand.vmem [shape: f32[1,128], index: 4, kind: input, shape index: {}]
  %s5 = inlined_call_operand.hbm [shape: f32[8,128], index: 5, kind: output, shape index: {}]
  %s6 = sld [smem:[#allocation0]]
  $region42: #{_mlp_pallas.1} parent=0
    _
  %s8 = ssub.s32 1, %s6
  %s9 = scalar_select 0, %s8, %s6
  $region1: #{_mlp_pallas.1} parent=0
    #allocation2 [shape = 'u8[4096]{0}', space=vmem, size = 0x1000, scoped, tag = 'input window, operand 0, single buffered']
    #allocation3 [shape = 's32[1]{0}', space=sflag, size = 0x4, scoped, tag = 'scoped memory for _mlp_pallas.1']
    #allocation4 [shape = 's32[1]{0}', space=sflag, size = 0x4, scoped, tag = 'scoped memory for _mlp_pallas.1']
    #allocation5 [shape = 'u8[65536]{0}', space=vmem, size = 0x10000, scoped, tag = 'input window, operand 1, single buffered']
    #allocation6 [shape = 's32[1]{0}', space=sflag, size = 0x4, scoped, tag = 'scoped memory for _mlp_pallas.1']
    #allocation7 [shape = 'u8[65536]{0}', space=vmem, size = 0x10000, scoped, tag = 'input window, operand 3, single buffered']
    #allocation8 [shape = 'u8[4096]{0}', space=vmem, size = 0x1000, scoped, tag = 'output window, operand 0, single buffered']
    %10 = vsyncpa [#allocation3], 0
    %11 = vsyncpa [#allocation6], 0
    %12 = vsyncpa [#allocation4], 0
    // Predicated region
    $region2: #{_mlp_pallas.1} parent=1 // pred_check
      _
    $region3: #{_mlp_pallas.1} parent=1 // pred_check_branch
      %14 = sbr.rel (0) target = $region5
    $region4: #{_mlp_pallas.1} parent=1 // pred_region
      %16 = vsyncadd [#allocation3], 0
      %s18 = sshll.u32 %s0, 4
      %s19 = int_to_ptr.hbm [resolvable:$true] %s18
      %s20 = sshll.u32 [#allocation2], 4
      %s21 = int_to_ptr.vmem [resolvable:$true] %s20
      %23 = dma.hbm_to_vmem [thread:$0]  %s19, 128, %s21, [#allocation3]
    $region5: #{_mlp_pallas.1} parent=1 // pred_fallthru
      _
    // Predicated region
    $region6: #{_mlp_pallas.1} parent=1 // pred_check
      _
    $region7: #{_mlp_pallas.1} parent=1 // pred_check_branch
      %25 = sbr.rel (0) target = $region9
    $region8: #{_mlp_pallas.1} parent=1 // pred_region
      %27 = vsyncadd [#allocation6], 0
      %s28 = sshll.u32 %s1, 4
      %s29 = int_to_ptr.hbm [resolvable:$true] %s28
      %s30 = sshll.u32 [#allocation5], 4
      %s31 = int_to_ptr.vmem [resolvable:$true] %s30
      %36 = dma.hbm_to_vmem [thread:$0]  %s29, 2048, %s31, [#allocation6], 128, 128, 8
    $region9: #{_mlp_pallas.1} parent=1 // pred_fallthru
      _
    // Predicated region
    $region10: #{_mlp_pallas.1} parent=1 // pred_check
      _
    $region11: #{_mlp_pallas.1} parent=1 // pred_check_branch
      %38 = sbr.rel (0) target = $region13
    $region12: #{_mlp_pallas.1} parent=1 // pred_region
      _
    $region13: #{_mlp_pallas.1} parent=1 // pred_fallthru
      _
    // Predicated region
    $region14: #{_mlp_pallas.1} parent=1 // pred_check
      _
    $region15: #{_mlp_pallas.1} parent=1 // pred_check_branch
      %40 = sbr.rel (0) target = $region17
    $region16: #{_mlp_pallas.1} parent=1 // pred_region
      %42 = vsyncadd [#allocation6], 0
      %s43 = sshll.u32 %s3, 4
      %s44 = int_to_ptr.hbm [resolvable:$true] %s43
      %s45 = sshll.u32 [#allocation7], 4
      %s46 = int_to_ptr.vmem [resolvable:$true] %s45
      %51 = dma.hbm_to_vmem [thread:$0]  %s44, 2048, %s46, [#allocation6], 128, 128, 8
    $region17: #{_mlp_pallas.1} parent=1 // pred_fallthru
      _
    // Predicated region
    $region18: #{_mlp_pallas.1} parent=1 // pred_check
      _
    $region19: #{_mlp_pallas.1} parent=1 // pred_check_branch
      %53 = sbr.rel (0) target = $region21
    $region20: #{_mlp_pallas.1} parent=1 // pred_region
      _
    $region21: #{_mlp_pallas.1} parent=1 // pred_fallthru
      _
    // Predicated region
    $region22: #{_mlp_pallas.1} parent=1 // pred_check
      _
    $region23: #{_mlp_pallas.1} parent=1 // pred_check_branch
      %55 = sbr.rel (0) target = $region25
    $region24: #{_mlp_pallas.1} parent=1 // pred_region
      %57 = dma.done [#allocation3], 128
    $region25: #{_mlp_pallas.1} parent=1 // pred_fallthru
      _
    // Predicated region
    $region26: #{_mlp_pallas.1} parent=1 // pred_check
      _
    $region27: #{_mlp_pallas.1} parent=1 // pred_check_branch
      %59 = sbr.rel (0) target = $region29
    $region28: #{_mlp_pallas.1} parent=1 // pred_region
      %61 = dma.done [#allocation6], 2048
    $region29: #{_mlp_pallas.1} parent=1 // pred_fallthru
      _
    // Predicated region
    $region30: #{_mlp_pallas.1} parent=1 // pred_check
      _
    $region31: #{_mlp_pallas.1} parent=1 // pred_check_branch
      %63 = sbr.rel (0) target = $region33
    $region32: #{_mlp_pallas.1} parent=1 // pred_region
      %65 = dma.done [#allocation6], 2048
    $region33: #{_mlp_pallas.1} parent=1 // pred_fallthru
      _
    %v66 = vld [vmem:[#allocation2] sm:$0xff]
    %v67 = vld [vmem:[#allocation5] sm:$0xff]
    %v68 = vld [vmem:[#allocation5 + $0x8] sm:$0xff]
    %v69 = vld [vmem:[#allocation5 + $0x10] sm:$0xff]
    %v70 = vld [vmem:[#allocation5 + $0x18] sm:$0xff]
    %v71 = vld [vmem:[#allocation5 + $0x20] sm:$0xff]
    %v72 = vld [vmem:[#allocation5 + $0x28] sm:$0xff]
    %v73 = vld [vmem:[#allocation5 + $0x30] sm:$0xff]
    %v74 = vld [vmem:[#allocation5 + $0x38] sm:$0xff]
    %v75 = vld [vmem:[#allocation5 + $0x40] sm:$0xff]
    %v76 = vld [vmem:[#allocation5 + $0x48] sm:$0xff]
    %v77 = vld [vmem:[#allocation5 + $0x50] sm:$0xff]
    %v78 = vld [vmem:[#allocation5 + $0x58] sm:$0xff]
    %v79 = vld [vmem:[#allocation5 + $0x60] sm:$0xff]
    %v80 = vld [vmem:[#allocation5 + $0x68] sm:$0xff]
    %v81 = vld [vmem:[#allocation5 + $0x70] sm:$0xff]
    %v82 = vld [vmem:[#allocation5 + $0x78] sm:$0xff]
    %v83 = vld [vmem:[%s2] sm:$0x1]
    %v85 = vperm.slane %v83, 0
    %87 = vmatpush.msra.mxu0 %v82
    %88 = vmatpush.msra.mxu0 %v81
    %89 = vmatpush.msra.mxu0 %v80
    %90 = vmatpush.msra.mxu0 %v79
    %91 = vmatpush.msra.mxu0 %v78
    %92 = vmatpush.msra.mxu0 %v77
    %93 = vmatpush.msra.mxu0 %v76
    %94 = vmatpush.msra.mxu0 %v75
    %95 = vmatpush.msra.mxu0 %v74
    %96 = vmatpush.msra.mxu0 %v73
    %97 = vmatpush.msra.mxu0 %v72
    %98 = vmatpush.msra.mxu0 %v71
    %99 = vmatpush.msra.mxu0 %v70
    %100 = vmatpush.msra.mxu0 %v69
    %101 = vmatpush.msra.mxu0 %v68
    %102 = vmatpush.msra.mxu0 %v67
    %103 = vmatmul.f32.gmra.mxu0 %v66
    %v104 = vpop.f32.mrf.mxu0
    %v105 = vadd.f32 %v85, %v104
    %106 = vdwg.mxu0
    %v107 = vmax.f32 %v105, 0.0
    %v108 = vld [vmem:[#allocation7] sm:$0xff]
    %v109 = vld [vmem:[#allocation7 + $0x8] sm:$0xff]
    %v110 = vld [vmem:[#allocation7 + $0x10] sm:$0xff]
    %v111 = vld [vmem:[#allocation7 + $0x18] sm:$0xff]
    %v112 = vld [vmem:[#allocation7 + $0x20] sm:$0xff]
    %v113 = vld [vmem:[#allocation7 + $0x28] sm:$0xff]
    %v114 = vld [vmem:[#allocation7 + $0x30] sm:$0xff]
    %v115 = vld [vmem:[#allocation7 + $0x38] sm:$0xff]
    %v116 = vld [vmem:[#allocation7 + $0x40] sm:$0xff]
    %v117 = vld [vmem:[#allocation7 + $0x48] sm:$0xff]
    %v118 = vld [vmem:[#allocation7 + $0x50] sm:$0xff]
    %v119 = vld [vmem:[#allocation7 + $0x58] sm:$0xff]
    %v120 = vld [vmem:[#allocation7 + $0x60] sm:$0xff]
    %v121 = vld [vmem:[#allocation7 + $0x68] sm:$0xff]
    %v122 = vld [vmem:[#allocation7 + $0x70] sm:$0xff]
    %v123 = vld [vmem:[#allocation7 + $0x78] sm:$0xff]
    %v124 = vld [vmem:[%s4] sm:$0x1]
    %v126 = vperm.slane %v124, 0
    %128 = vmatpush.msra.mxu0 %v123
    %129 = vmatpush.msra.mxu0 %v122
    %130 = vmatpush.msra.mxu0 %v121
    %131 = vmatpush.msra.mxu0 %v120
    %132 = vmatpush.msra.mxu0 %v119
    %133 = vmatpush.msra.mxu0 %v118
    %134 = vmatpush.msra.mxu0 %v117
    %135 = vmatpush.msra.mxu0 %v116
    %136 = vmatpush.msra.mxu0 %v115
    %137 = vmatpush.msra.mxu0 %v114
    %138 = vmatpush.msra.mxu0 %v113
    %139 = vmatpush.msra.mxu0 %v112
    %140 = vmatpush.msra.mxu0 %v111
    %141 = vmatpush.msra.mxu0 %v110
    %142 = vmatpush.msra.mxu0 %v109
    %143 = vmatpush.msra.mxu0 %v108
    %144 = vmatmul.f32.gmra.mxu0 %v107
    %v145 = vpop.f32.mrf.mxu0
    %v146 = vadd.f32 %v126, %v145
    %147 = vdwg.mxu0
    %v148 = vmax.f32 %v146, 0.0
    %149 = vst [vmem:[#allocation8] sm:$0xff] %v148
    // Predicated region
    $region34: #{_mlp_pallas.1} parent=1 // pred_check
      _
    $region35: #{_mlp_pallas.1} parent=1 // pred_check_branch
      %151 = sbr.rel (0) target = $region37
    $region36: #{_mlp_pallas.1} parent=1 // pred_region
      %153 = vsyncadd [#allocation4], 0
      %s155 = sshll.u32 [#allocation8], 4
      %s156 = int_to_ptr.vmem [resolvable:$true] %s155
      %s157 = sshll.u32 %s5, 4
      %s158 = int_to_ptr.hbm [resolvable:$true] %s157
      %160 = dma.vmem_to_hbm [thread:$0]  %s156, 128, %s158, [#allocation4]
    $region37: #{_mlp_pallas.1} parent=1 // pred_fallthru
      _
    // Predicated region
    $region38: #{_mlp_pallas.1} parent=1 // pred_check
      _
    $region39: #{_mlp_pallas.1} parent=1 // pred_check_branch
      %162 = sbr.rel (0) target = $region41
    $region40: #{_mlp_pallas.1} parent=1 // pred_region
      %164 = dma.done [#allocation4], 128
    $region41: #{_mlp_pallas.1} parent=1 // pred_fallthru
      _
    %165 = vsyncpa [#allocation3], 1
    %166 = vsyncpa [#allocation6], 1
    %167 = vsyncpa [#allocation4], 1

</llo_original>
